<compile_context>
chip_gen: v6e
topology: v6e:2x2x1
jax: 0.10.0
libtpu: 0.0.40
codegen_flags: <defaults>
</compile_context>

<pallas_src>
import jax
import jax.numpy as jnp
from jax.experimental import pallas as pl
from jax.experimental.pallas import tpu as pltpu

LANE = 128
SUBLANE_BF16 = 16


def _round_up(x, m):
    return ((x + m - 1) // m) * m


def q_mlp_kernel(x_ref, w1_ref, b1_ref, w2_ref, b2_ref, w3_ref, b3_ref, o_ref,
                 xpad_ref):
    obs_size = x_ref.shape[-1]
    act_size = o_ref.shape[-1]

    # Zero-pad the narrow obs tile to 128 lanes in VMEM (HBM only sees (TB, obs_size)).
    # Zeroing is required every step: padded lanes hit the zero rows of w1, but
    # uninitialized VMEM could contain Inf/NaN bit patterns (0 * Inf = NaN).
    xpad_ref[...] = jnp.zeros_like(xpad_ref)
    xpad_ref[:, :obs_size] = x_ref[...].astype(xpad_ref.dtype)

    # layer 1: Linear (bf16 x bf16 -> f32 accumulate) + Tanh (f32 on the EUP)
    h1 = jnp.tanh(
        jnp.dot(xpad_ref[...], w1_ref[...], preferred_element_type=jnp.float32)
        + b1_ref[...])
    # layer 2: Linear + Tanh
    h2 = jnp.tanh(
        jnp.dot(h1.astype(w2_ref.dtype), w2_ref[...],
                preferred_element_type=jnp.float32)
        + b2_ref[...])
    # layer 3: Linear (Identity output activation); store only the useful lanes.
    q = (jnp.dot(h2.astype(w3_ref.dtype), w3_ref[...],
                 preferred_element_type=jnp.float32)
         + b3_ref[...])
    o_ref[...] = q[:, :act_size].astype(o_ref.dtype)


def prepare_params(params, compute_dtype=jnp.bfloat16):
    """Zero-pad weights/biases to lane (128) multiples and cast weights to bf16.

    Padding is inert: padded weight rows/cols and bias entries are zero, and the
    padded obs lanes (built in-kernel) multiply the zero weight rows; tanh(0)=0
    keeps padded hidden lanes at zero.
    """
    w1, b1, w2, b2, w3, b3 = params

    def pad_w(w):
        i, o = w.shape
        ip, op = _round_up(i, LANE), _round_up(o, LANE)
        return jnp.zeros((ip, op), compute_dtype).at[:i, :o].set(w.astype(compute_dtype))

    def pad_b(b):
        o = b.shape[-1]
        op = _round_up(o, LANE)
        return jnp.zeros((1, op), jnp.float32).at[:, :o].set(
            b.reshape(1, o).astype(jnp.float32))

    return (pad_w(w1), pad_b(b1), pad_w(w2), pad_b(b2), pad_w(w3), pad_b(b3))


def q_forward(obs, prepared_params, act_size, *, max_tb=1024):
    """obs: (B, obs_size) f32 -> (B, act_size) f32, using pre-padded bf16 params."""
    w1, b1, w2, b2, w3, b3 = prepared_params
    B, obs_size = obs.shape
    DP, H1P = w1.shape
    _, H2P = w2.shape
    _, AP = w3.shape

    # Batch tiling: TB is a multiple of 16 (bf16 sublane packing). Aim for >= 2 grid
    # steps whenever the batch allows it so ("parallel",) can shard the batch over
    # both v7x TensorCores, capped at max_tb (per-step VMEM stays well under limits
    # on v5e/v6e/v7x at max_tb<=2048, so no explicit vmem_limit_bytes is needed).
    B16 = _round_up(B, SUBLANE_BF16)
    if B16 > SUBLANE_BF16:
        TB = min(max_tb, _round_up(pl.cdiv(B16, 2), SUBLANE_BF16))
    else:
        TB = B16
    Bp = _round_up(B16, TB)
    grid = (Bp // TB,)

    # Only row-pad (when B does not divide into TB); the feature dim stays natural.
    x = obs
    if Bp != B:
        x = jnp.zeros((Bp, obs_size), obs.dtype).at[:B, :].set(obs)

    flops = 2 * Bp * (DP * H1P + H1P * H2P + H2P * AP)
    transcendentals = Bp * (H1P + H2P)
    bytes_accessed = int(
        Bp * obs_size * x.dtype.itemsize                              # narrow obs stream
        + sum(int(a.size) * a.dtype.itemsize for a in prepared_params)  # resident params
        + Bp * act_size * 4                                           # narrow f32 output
    )

    out = pl.pallas_call(
        q_mlp_kernel,
        out_shape=jax.ShapeDtypeStruct((Bp, act_size), jnp.float32),
        grid=grid,
        in_specs=[
            # obs tile: streamed per step at natural width (no HBM padding)
            pl.BlockSpec((TB, obs_size), lambda i: (i, 0)),
            # weights / biases: constant index_maps -> DMA'd once, VMEM-resident
            pl.BlockSpec((DP, H1P), lambda i: (0, 0)),
            pl.BlockSpec((1, H1P), lambda i: (0, 0)),
            pl.BlockSpec((H1P, H2P), lambda i: (0, 0)),
            pl.BlockSpec((1, H2P), lambda i: (0, 0)),
            pl.BlockSpec((H2P, AP), lambda i: (0, 0)),
            pl.BlockSpec((1, AP), lambda i: (0, 0)),
        ],
        # narrow output: only act_size lanes ever hit HBM
        out_specs=pl.BlockSpec((TB, act_size), lambda i: (i, 0)),
        scratch_shapes=[pltpu.VMEM((TB, DP), w1.dtype)],   # in-kernel padded obs tile
        compiler_params=pltpu.CompilerParams(
            dimension_semantics=("parallel",),   # lets v7x shard the batch over 2 TCs
        ),
        cost_estimate=pl.CostEstimate(
            flops=flops,
            transcendentals=transcendentals,
            bytes_accessed=bytes_accessed,
        ),
    )(x, w1, b1, w2, b2, w3, b3)

    return out[:B, :]


def init_q_params(key, obs_size, act_size, hidden=(64, 64)):
    """Deterministic synthetic init (shapes match nn.Linear layers of Q)."""
    sizes = [obs_size] + list(hidden) + [act_size]
    params = []
    for j in range(len(sizes) - 1):
        key, kw, kb = jax.random.split(key, 3)
        fan_in = sizes[j]
        bound = 1.0 / jnp.sqrt(fan_in)
        w = jax.random.uniform(kw, (sizes[j], sizes[j + 1]), jnp.float32, -bound, bound)
        b = jax.random.uniform(kb, (1, sizes[j + 1]), jnp.float32, -bound, bound)
        params += [w, b]
    return tuple(params)


def q_forward_ref(obs, params):
    """Pure-JAX reference matching the kernel's bf16-matmul / f32-accumulate math."""
    w1, b1, w2, b2, w3, b3 = params
    bf = jnp.bfloat16

    def lin(x, w, b):
        return (jnp.dot(x.astype(bf), w.astype(bf),
                        preferred_element_type=jnp.float32)
                + b.astype(jnp.float32))

    h1 = jnp.tanh(lin(obs, w1, b1))
    h2 = jnp.tanh(lin(h1, w2, b2))
    return lin(h2, w3, b3)


if __name__ == "__main__":
    OBS, ACT = 8, 4
    key = jax.random.PRNGKey(0)
    k_obs, k_par, k_obs2 = jax.random.split(key, 3)

    params = init_q_params(k_par, OBS, ACT)
    prepared = prepare_params(params)

    # Case 1: tiny batch (typical single-env inference), single grid step.
    obs = jax.random.normal(k_obs, (8, OBS), jnp.float32)
    q = jax.block_until_ready(q_forward(obs, prepared, ACT))
    q_ref = q_forward_ref(obs, params)
    assert q.shape == (8, ACT), q.shape
    assert jnp.allclose(q, q_ref, atol=1e-4, rtol=1e-4), float(jnp.abs(q - q_ref).max())

    # Case 2: larger batch exercising multiple grid steps + batch row padding.
    obs2 = jax.random.normal(k_obs2, (200, OBS), jnp.float32)
    q2 = jax.block_until_ready(q_forward(obs2, prepared, ACT, max_tb=64))
    q2_ref = q_forward_ref(obs2, params)
    assert q2.shape == (200, ACT), q2.shape
    assert jnp.allclose(q2, q2_ref, atol=1e-4, rtol=1e-4), float(jnp.abs(q2 - q2_ref).max())

    # TODO(synk): forward_mask's torch.gather over the action column is left to plain
    # JAX (jnp.take_along_axis) outside the kernel; not part of forward().
    print("KERNEL_OK")
</pallas_src>

<mosaic_0001>
module attributes {stable_mosaic.version = 11 : i64} {
  func.func @q_mlp_kernel(%arg0: i32, %arg1: memref<16x8xf32, #tpu.memory_space<vmem>>, %arg2: memref<128x128xbf16, #tpu.memory_space<vmem>>, %arg3: memref<1x128xf32, #tpu.memory_space<vmem>>, %arg4: memref<128x128xbf16, #tpu.memory_space<vmem>>, %arg5: memref<1x128xf32, #tpu.memory_space<vmem>>, %arg6: memref<128x128xbf16, #tpu.memory_space<vmem>>, %arg7: memref<1x128xf32, #tpu.memory_space<vmem>>, %arg8: memref<16x4xf32, #tpu.memory_space<vmem>>, %arg9: memref<16x128xbf16, #tpu.memory_space<vmem>>) attributes {dimension_semantics = [#tpu.dimension_semantics<parallel>], iteration_bounds = array<i64: 1>, scalar_prefetch = 0 : i64, scratch_operands = 1 : i64, tpu.core_type = #tpu.core_type<tc>, window_params = [{transform_indices = @transform_0, window_bounds = array<i64: 16, 8>}, {pipeline_mode = #tpu.pipeline_mode<synchronous>, transform_indices = @transform_1, window_bounds = array<i64: 128, 128>}, {pipeline_mode = #tpu.pipeline_mode<synchronous>, transform_indices = @transform_2, window_bounds = array<i64: 1, 128>}, {pipeline_mode = #tpu.pipeline_mode<synchronous>, transform_indices = @transform_3, window_bounds = array<i64: 128, 128>}, {pipeline_mode = #tpu.pipeline_mode<synchronous>, transform_indices = @transform_4, window_bounds = array<i64: 1, 128>}, {pipeline_mode = #tpu.pipeline_mode<synchronous>, transform_indices = @transform_5, window_bounds = array<i64: 128, 128>}, {pipeline_mode = #tpu.pipeline_mode<synchronous>, transform_indices = @transform_6, window_bounds = array<i64: 1, 128>}, {transform_indices = @transform_7, window_bounds = array<i64: 16, 4>}]} {
    %cst = arith.constant 0.000000e+00 : bf16
    %0 = vector.broadcast %cst : bf16 to vector<16x128xbf16>
    %c0 = arith.constant 0 : index
    %c0_0 = arith.constant 0 : index
    %1 = vector.load %arg9[%c0, %c0_0] : memref<16x128xbf16, #tpu.memory_space<vmem>>, vector<16x128xbf16>
    tpu.vector_store %arg9[%c0, %c0_0], %0 {strides = array<i32>} : memref<16x128xbf16, #tpu.memory_space<vmem>>, vector<16x128xbf16>,
    %c0_1 = arith.constant 0 : index
    %c0_2 = arith.constant 0 : index
    %2 = vector.load %arg1[%c0_1, %c0_2] : memref<16x8xf32, #tpu.memory_space<vmem>>, vector<16x8xf32>
    %3 = arith.truncf %2 : vector<16x8xf32> to vector<16x8xbf16>
    %c0_3 = arith.constant 0 : index
    %c0_4 = arith.constant 0 : index
    %4 = vector.load %arg9[%c0_3, %c0_4] : memref<16x128xbf16, #tpu.memory_space<vmem>>, vector<16x8xbf16>
    tpu.vector_store %arg9[%c0_3, %c0_4], %3 {strides = array<i32>} : memref<16x128xbf16, #tpu.memory_space<vmem>>, vector<16x8xbf16>,
    %c0_5 = arith.constant 0 : index
    %c0_6 = arith.constant 0 : index
    %5 = vector.load %arg9[%c0_5, %c0_6] : memref<16x128xbf16, #tpu.memory_space<vmem>>, vector<16x128xbf16>
    %c0_7 = arith.constant 0 : index
    %c0_8 = arith.constant 0 : index
    %6 = vector.load %arg2[%c0_7, %c0_8] : memref<128x128xbf16, #tpu.memory_space<vmem>>, vector<128x128xbf16>
    %cst_9 = arith.constant dense<0.000000e+00> : vector<16x128xf32>
    %7 = tpu.matmul %5, %6, %cst_9 {dimension_numbers = #tpu.dot_dimension_numbers<[1], [0], [0], [1], [0, 0, 1, 1], [], []>} : vector<16x128xbf16>, vector<128x128xbf16>, vector<16x128xf32> -> vector<16x128xf32>
    %c0_10 = arith.constant 0 : index
    %c0_11 = arith.constant 0 : index
    %8 = vector.load %arg3[%c0_10, %c0_11] : memref<1x128xf32, #tpu.memory_space<vmem>>, vector<1x128xf32>
    %9 = vector.broadcast %8 : vector<1x128xf32> to vector<16x128xf32>
    %10 = arith.addf %7, %9 : vector<16x128xf32>
    %11 = math.tanh %10 : vector<16x128xf32>
    %12 = arith.truncf %11 : vector<16x128xf32> to vector<16x128xbf16>
    %c0_12 = arith.constant 0 : index
    %c0_13 = arith.constant 0 : index
    %13 = vector.load %arg4[%c0_12, %c0_13] : memref<128x128xbf16, #tpu.memory_space<vmem>>, vector<128x128xbf16>
    %cst_14 = arith.constant dense<0.000000e+00> : vector<16x128xf32>
    %14 = tpu.matmul %12, %13, %cst_14 {dimension_numbers = #tpu.dot_dimension_numbers<[1], [0], [0], [1], [0, 0, 1, 1], [], []>} : vector<16x128xbf16>, vector<128x128xbf16>, vector<16x128xf32> -> vector<16x128xf32>
    %c0_15 = arith.constant 0 : index
    %c0_16 = arith.constant 0 : index
    %15 = vector.load %arg5[%c0_15, %c0_16] : memref<1x128xf32, #tpu.memory_space<vmem>>, vector<1x128xf32>
    %16 = vector.broadcast %15 : vector<1x128xf32> to vector<16x128xf32>
    %17 = arith.addf %14, %16 : vector<16x128xf32>
    %18 = math.tanh %17 : vector<16x128xf32>
    %19 = arith.truncf %18 : vector<16x128xf32> to vector<16x128xbf16>
    %c0_17 = arith.constant 0 : index
    %c0_18 = arith.constant 0 : index
    %20 = vector.load %arg6[%c0_17, %c0_18] : memref<128x128xbf16, #tpu.memory_space<vmem>>, vector<128x128xbf16>
    %cst_19 = arith.constant dense<0.000000e+00> : vector<16x128xf32>
    %21 = tpu.matmul %19, %20, %cst_19 {dimension_numbers = #tpu.dot_dimension_numbers<[1], [0], [0], [1], [0, 0, 1, 1], [], []>} : vector<16x128xbf16>, vector<128x128xbf16>, vector<16x128xf32> -> vector<16x128xf32>
    %c0_20 = arith.constant 0 : index
    %c0_21 = arith.constant 0 : index
    %22 = vector.load %arg7[%c0_20, %c0_21] : memref<1x128xf32, #tpu.memory_space<vmem>>, vector<1x128xf32>
    %23 = vector.broadcast %22 : vector<1x128xf32> to vector<16x128xf32>
    %24 = arith.addf %21, %23 : vector<16x128xf32>
    %25 = vector.extract_strided_slice %24 {offsets = [0, 0], sizes = [16, 4], strides = [1, 1]} : vector<16x128xf32> to vector<16x4xf32>
    %c0_22 = arith.constant 0 : index
    %c0_23 = arith.constant 0 : index
    %26 = vector.load %arg8[%c0_22, %c0_23] : memref<16x4xf32, #tpu.memory_space<vmem>>, vector<16x4xf32>
    tpu.vector_store %arg8[%c0_22, %c0_23], %25 {strides = array<i32>} : memref<16x4xf32, #tpu.memory_space<vmem>>, vector<16x4xf32>,
    return
  }
  func.func @transform_0(%arg0: i32) -> (i32, i32) {
    %c0_i32 = arith.constant 0 : i32
    %c0_i32_0 = arith.constant 0 : i32
    return %arg0, %c0_i32 : i32, i32
  }
  func.func @transform_1(%arg0: i32) -> (i32, i32) {
    %c0_i32 = arith.constant 0 : i32
    %c0_i32_0 = arith.constant 0 : i32
    %c0_i32_1 = arith.constant 0 : i32
    return %c0_i32, %c0_i32_0 : i32, i32
  }
  func.func @transform_2(%arg0: i32) -> (i32, i32) {
    %c0_i32 = arith.constant 0 : i32
    %c0_i32_0 = arith.constant 0 : i32
    %c0_i32_1 = arith.constant 0 : i32
    return %c0_i32, %c0_i32_0 : i32, i32
  }
  func.func @transform_3(%arg0: i32) -> (i32, i32) {
    %c0_i32 = arith.constant 0 : i32
    %c0_i32_0 = arith.constant 0 : i32
    %c0_i32_1 = arith.constant 0 : i32
    return %c0_i32, %c0_i32_0 : i32, i32
  }
  func.func @transform_4(%arg0: i32) -> (i32, i32) {
    %c0_i32 = arith.constant 0 : i32
    %c0_i32_0 = arith.constant 0 : i32
    %c0_i32_1 = arith.constant 0 : i32
    return %c0_i32, %c0_i32_0 : i32, i32
  }
  func.func @transform_5(%arg0: i32) -> (i32, i32) {
    %c0_i32 = arith.constant 0 : i32
    %c0_i32_0 = arith.constant 0 : i32
    %c0_i32_1 = arith.constant 0 : i32
    return %c0_i32, %c0_i32_0 : i32, i32
  }
  func.func @transform_6(%arg0: i32) -> (i32, i32) {
    %c0_i32 = arith.constant 0 : i32
    %c0_i32_0 = arith.constant 0 : i32
    %c0_i32_1 = arith.constant 0 : i32
    return %c0_i32, %c0_i32_0 : i32, i32
  }
  func.func @transform_7(%arg0: i32) -> (i32, i32) {
    %c0_i32 = arith.constant 0 : i32
    %c0_i32_0 = arith.constant 0 : i32
    return %arg0, %c0_i32 : i32, i32
  }
}

</mosaic_0001>

<llo_original>
// kernel: tpu_custom_call.1
$region0: #{tpu_custom_call.1}
  #allocation0 [shape = 'u32[]', space=smem, size = 0x4, offset = 0x4, fixed_abs, tag = 'smem constant byte address 0x4 - core index']
  #allocation1 [shape = 'u32[144,128]{1,0:T(1,128)}', space=vmem, size = 0x12000, scoped, tag = 'internal scratch']
  #allocation2 [shape = 'bf16[16,128]{1,0:T(8,128)(2,1)}', space=vmem, size = 0x1000, scoped, tag = 'scratch operand']
  %s0 = inlined_call_operand.vmem [shape: f32[16,8], index: 0, kind: input, shape index: {}]
  %s1 = inlined_call_operand.hbm [shape: bf16[128,128], index: 1, kind: input, shape index: {}]
  %s2 = inlined_call_operand.vmem [shape: f32[1,128], index: 2, kind: input, shape index: {}]
  %s3 = inlined_call_operand.hbm [shape: bf16[128,128], index: 3, kind: input, shape index: {}]
  %s4 = inlined_call_operand.vmem [shape: f32[1,128], index: 4, kind: input, shape index: {}]
  %s5 = inlined_call_operand.hbm [shape: bf16[128,128], index: 5, kind: input, shape index: {}]
  %s6 = inlined_call_operand.vmem [shape: f32[1,128], index: 6, kind: input, shape index: {}]
  %s7 = inlined_call_operand.vmem [shape: f32[16,4], index: 7, kind: output, shape index: {}]
  %s8 = sld [smem:[#allocation0]]
  $region50: #{tpu_custom_call.1} parent=0
    _
  %s10 = ssub.s32 1, %s8
  %s11 = scalar_select 0, %s10, %s8
  $region1: #{tpu_custom_call.1} parent=0
    #allocation3 [shape = 'u8[32768]{0}', space=vmem, size = 0x8000, scoped, tag = 'input window, operand 1, single buffered']
    #allocation4 [shape = 's32[1]{0}', space=sflag, size = 0x4, scoped, tag = 'scoped memory for tpu_custom_call.1']
    #allocation5 [shape = 'u8[32768]{0}', space=vmem, size = 0x8000, scoped, tag = 'input window, operand 3, single buffered']
    #allocation6 [shape = 's32[1]{0}', space=sflag, size = 0x4, scoped, tag = 'scoped memory for tpu_custom_call.1']
    #allocation7 [shape = 'u8[32768]{0}', space=vmem, size = 0x8000, scoped, tag = 'input window, operand 5, single buffered']
    %12 = vsyncpa [#allocation4], 0
    %13 = vsyncpa [#allocation6], 0
    // Predicated region
    $region2: #{tpu_custom_call.1} parent=1 // pred_check
      _
    $region3: #{tpu_custom_call.1} parent=1 // pred_check_branch
      %15 = sbr.rel (0) target = $region5
    $region4: #{tpu_custom_call.1} parent=1 // pred_region
      _
    $region5: #{tpu_custom_call.1} parent=1 // pred_fallthru
      _
    // Predicated region
    $region6: #{tpu_custom_call.1} parent=1 // pred_check
      _
    $region7: #{tpu_custom_call.1} parent=1 // pred_check_branch
      %17 = sbr.rel (0) target = $region9
    $region8: #{tpu_custom_call.1} parent=1 // pred_region
      %s19 = ssub.s32 1024, 1024
      %20 = vsyncadd [#allocation4], %s19
      %s21 = sshll.u32 [#allocation3], 4
      %s22 = int_to_ptr.vmem [resolvable:$true] %s21
      %27 = dma.hbm_to_vmem [thread:$0]  %s1, 1024, %s22, [#allocation4], 64, 64, 4
    $region9: #{tpu_custom_call.1} parent=1 // pred_fallthru
      _
    // Predicated region
    $region10: #{tpu_custom_call.1} parent=1 // pred_check
      _
    $region11: #{tpu_custom_call.1} parent=1 // pred_check_branch
      %29 = sbr.rel (0) target = $region13
    $region12: #{tpu_custom_call.1} parent=1 // pred_region
      _
    $region13: #{tpu_custom_call.1} parent=1 // pred_fallthru
      _
    // Predicated region
    $region14: #{tpu_custom_call.1} parent=1 // pred_check
      _
    $region15: #{tpu_custom_call.1} parent=1 // pred_check_branch
      %31 = sbr.rel (0) target = $region17
    $region16: #{tpu_custom_call.1} parent=1 // pred_region
      %s33 = ssub.s32 1024, 1024
      %34 = vsyncadd [#allocation6], %s33
      %s35 = sshll.u32 [#allocation5], 4
      %s36 = int_to_ptr.vmem [resolvable:$true] %s35
      %41 = dma.hbm_to_vmem [thread:$0]  %s3, 1024, %s36, [#allocation6], 64, 64, 4
    $region17: #{tpu_custom_call.1} parent=1 // pred_fallthru
      _
    // Predicated region
    $region18: #{tpu_custom_call.1} parent=1 // pred_check
      _
    $region19: #{tpu_custom_call.1} parent=1 // pred_check_branch
      %43 = sbr.rel (0) target = $region21
    $region20: #{tpu_custom_call.1} parent=1 // pred_region
      _
    $region21: #{tpu_custom_call.1} parent=1 // pred_fallthru
      _
    // Predicated region
    $region22: #{tpu_custom_call.1} parent=1 // pred_check
      _
    $region23: #{tpu_custom_call.1} parent=1 // pred_check_branch
      %45 = sbr.rel (0) target = $region25
    $region24: #{tpu_custom_call.1} parent=1 // pred_region
      %s47 = ssub.s32 1024, 1024
      %48 = vsyncadd [#allocation6], %s47
      %s49 = sshll.u32 [#allocation7], 4
      %s50 = int_to_ptr.vmem [resolvable:$true] %s49
      %55 = dma.hbm_to_vmem [thread:$0]  %s5, 1024, %s50, [#allocation6], 64, 64, 4
    $region25: #{tpu_custom_call.1} parent=1 // pred_fallthru
      _
    // Predicated region
    $region26: #{tpu_custom_call.1} parent=1 // pred_check
      _
    $region27: #{tpu_custom_call.1} parent=1 // pred_check_branch
      %57 = sbr.rel (0) target = $region29
    $region28: #{tpu_custom_call.1} parent=1 // pred_region
      _
    $region29: #{tpu_custom_call.1} parent=1 // pred_fallthru
      _
    // Predicated region
    $region30: #{tpu_custom_call.1} parent=1 // pred_check
      _
    $region31: #{tpu_custom_call.1} parent=1 // pred_check_branch
      %59 = sbr.rel (0) target = $region33
    $region32: #{tpu_custom_call.1} parent=1 // pred_region
      %60 = dma.done [#allocation4], 1024
    $region33: #{tpu_custom_call.1} parent=1 // pred_fallthru
      _
    // Predicated region
    $region34: #{tpu_custom_call.1} parent=1 // pred_check
      _
    $region35: #{tpu_custom_call.1} parent=1 // pred_check_branch
      %62 = sbr.rel (0) target = $region37
    $region36: #{tpu_custom_call.1} parent=1 // pred_region
      %63 = dma.done [#allocation6], 1024
    $region37: #{tpu_custom_call.1} parent=1 // pred_fallthru
      _
    // Predicated region
    $region38: #{tpu_custom_call.1} parent=1 // pred_check
      _
    $region39: #{tpu_custom_call.1} parent=1 // pred_check_branch
      %65 = sbr.rel (0) target = $region41
    $region40: #{tpu_custom_call.1} parent=1 // pred_region
      %66 = dma.done [#allocation6], 1024
    $region41: #{tpu_custom_call.1} parent=1 // pred_fallthru
      _
    %68 = vst [vmem:[#allocation2] sm:$0xf] 0
    %69 = vst [vmem:[#allocation2 + $0x4] sm:$0xf] 0
    %v70 = vld [vmem:[%s0] sm:$0xff]
    %v71 = vld [vmem:[%s0 + $0x8] sm:$0xff]
    %v72 = vpack.c.bf16 %v71, %v70
    %v74 = vunpack.c.l.b16 %v72
    %v75 = vunpack.c.h.b16 %v72
    %v76 = vpack.c.b16 %v74, %v74
    %v77 = vpack.c.b16 %v75, %v75
    %vm80 = vcmask 60416
    %81 = vst.msk [vmem:[#allocation2] sm:$0xf] %vm80, %v76
    %82 = vst.msk [vmem:[#allocation2 + $0x4] sm:$0xf] %vm80, %v77
    %v83 = vld [vmem:[#allocation2] sm:$0xf]
    %v84 = vld [vmem:[#allocation2 + $0x4] sm:$0xf]
    %v85 = vld [vmem:[#allocation3] sm:$0xf]
    %v86 = vld [vmem:[#allocation3 + $0x4] sm:$0xf]
    %v87 = vld [vmem:[#allocation3 + $0x8] sm:$0xf]
    %v88 = vld [vmem:[#allocation3 + $0xc] sm:$0xf]
    %v89 = vld [vmem:[#allocation3 + $0x10] sm:$0xf]
    %v90 = vld [vmem:[#allocation3 + $0x14] sm:$0xf]
    %v91 = vld [vmem:[#allocation3 + $0x18] sm:$0xf]
    %v92 = vld [vmem:[#allocation3 + $0x1c] sm:$0xf]
    %v93 = vld [vmem:[#allocation3 + $0x20] sm:$0xf]
    %v94 = vld [vmem:[#allocation3 + $0x24] sm:$0xf]
    %v95 = vld [vmem:[#allocation3 + $0x28] sm:$0xf]
    %v96 = vld [vmem:[#allocation3 + $0x2c] sm:$0xf]
    %v97 = vld [vmem:[#allocation3 + $0x30] sm:$0xf]
    %v98 = vld [vmem:[#allocation3 + $0x34] sm:$0xf]
    %v99 = vld [vmem:[#allocation3 + $0x38] sm:$0xf]
    %v100 = vld [vmem:[#allocation3 + $0x3c] sm:$0xf]
    %v101 = vld [vmem:[%s2] sm:$0x1]
    %v103 = vlaneseq
    %v104 = vshrl.u32 %v103, 7
    %v105 = vsub.s32 0, %v104
    %v106 = vrot.slane %v101, %v105
    %v110 = vunpack.c.l.b16 %v83
    %v111 = vunpack.c.l.b16 %v84
    %v112 = vpack.c.b16 %v111, %v110
    %v130 = vunpack.c.l.b16 %v85
    %v131 = vunpack.c.l.b16 %v86
    %v132 = vunpack.c.l.b16 %v87
    %v133 = vunpack.c.l.b16 %v88
    %v134 = vunpack.c.l.b16 %v89
    %v135 = vunpack.c.l.b16 %v90
    %v136 = vunpack.c.l.b16 %v91
    %v137 = vunpack.c.l.b16 %v92
    %v138 = vunpack.c.l.b16 %v93
    %v139 = vunpack.c.l.b16 %v94
    %v140 = vunpack.c.l.b16 %v95
    %v141 = vunpack.c.l.b16 %v96
    %v142 = vunpack.c.l.b16 %v97
    %v143 = vunpack.c.l.b16 %v98
    %v144 = vunpack.c.l.b16 %v99
    %v145 = vunpack.c.l.b16 %v100
    %v146 = vpack.c.b16 %v131, %v130
    %v147 = vpack.c.b16 %v133, %v132
    %v148 = vpack.c.b16 %v135, %v134
    %v149 = vpack.c.b16 %v137, %v136
    %v150 = vpack.c.b16 %v139, %v138
    %v151 = vpack.c.b16 %v141, %v140
    %v152 = vpack.c.b16 %v143, %v142
    %v153 = vpack.c.b16 %v145, %v144
    %162 = vmatprep.subr.bf16.mxu0 0
    %163 = vmatpush1.bf16.msra.mxu0 %v153
    %164 = vmatprep.subr.bf16.mxu0 0
    %165 = vmatpush1.bf16.msra.mxu0 %v152
    %166 = vmatprep.subr.bf16.mxu0 0
    %167 = vmatpush1.bf16.msra.mxu0 %v151
    %168 = vmatprep.subr.bf16.mxu0 0
    %169 = vmatpush1.bf16.msra.mxu0 %v150
    %170 = vmatprep.subr.bf16.mxu0 0
    %171 = vmatpush1.bf16.msra.mxu0 %v149
    %172 = vmatprep.subr.bf16.mxu0 0
    %173 = vmatpush1.bf16.msra.mxu0 %v148
    %174 = vmatprep.subr.bf16.mxu0 0
    %175 = vmatpush1.bf16.msra.mxu0 %v147
    %176 = vmatprep.subr.bf16.mxu0 0
    %177 = vmatpush1.bf16.msra.mxu0 %v146
    %178 = vmatprep.subr.bf16.mxu0 0
    %179 = vmatpush2.bf16.msra.mxu0 0
    %180 = vmatprep.subr.bf16.mxu0 0
    %181 = vmatpush2.bf16.msra.mxu0 0
    %182 = vmatprep.subr.bf16.mxu0 0
    %183 = vmatpush2.bf16.msra.mxu0 0
    %184 = vmatprep.subr.bf16.mxu0 0
    %185 = vmatpush2.bf16.msra.mxu0 0
    %186 = vmatprep.subr.bf16.mxu0 0
    %187 = vmatpush2.bf16.msra.mxu0 0
    %188 = vmatprep.subr.bf16.mxu0 0
    %189 = vmatpush2.bf16.msra.mxu0 0
    %190 = vmatprep.subr.bf16.mxu0 0
    %191 = vmatpush2.bf16.msra.mxu0 0
    %192 = vmatprep.subr.bf16.mxu0 0
    %193 = vmatpush2.bf16.msra.mxu0 0
    %194 = vmatprep.mubr.bf16.mxu0 0
    %195 = vmatmul.mubr.bf16.gmra.mxu0 %v112
    %v196 = vpop.f32.mrf.mxu0
    %v197 = vadd.f32 %v106, %v196
    %v198 = vpop.f32.mrf.mxu0
    %v199 = vpop.f32.mrf.mxu0
    %v200 = vadd.f32 %v106, %v199
    %v201 = vpop.f32.mrf.mxu0
    %202 = vdwg.mxu0
    %v203 = vtanh.pop %v197
    %v204 = vtanh.pop %v200
    %v205 = vpack.c.bf16 %v204, %v203
    %v206 = vld [vmem:[#allocation5] sm:$0xf]
    %v207 = vld [vmem:[#allocation5 + $0x4] sm:$0xf]
    %v208 = vld [vmem:[#allocation5 + $0x8] sm:$0xf]
    %v209 = vld [vmem:[#allocation5 + $0xc] sm:$0xf]
    %v210 = vld [vmem:[#allocation5 + $0x10] sm:$0xf]
    %v211 = vld [vmem:[#allocation5 + $0x14] sm:$0xf]
    %v212 = vld [vmem:[#allocation5 + $0x18] sm:$0xf]
    %v213 = vld [vmem:[#allocation5 + $0x1c] sm:$0xf]
    %v214 = vld [vmem:[#allocation5 + $0x20] sm:$0xf]
    %v215 = vld [vmem:[#allocation5 + $0x24] sm:$0xf]
    %v216 = vld [vmem:[#allocation5 + $0x28] sm:$0xf]
    %v217 = vld [vmem:[#allocation5 + $0x2c] sm:$0xf]
    %v218 = vld [vmem:[#allocation5 + $0x30] sm:$0xf]
    %v219 = vld [vmem:[#allocation5 + $0x34] sm:$0xf]
    %v220 = vld [vmem:[#allocation5 + $0x38] sm:$0xf]
    %v221 = vld [vmem:[#allocation5 + $0x3c] sm:$0xf]
    %v222 = vld [vmem:[%s4] sm:$0x1]
    %v224 = vlaneseq
    %v225 = vshrl.u32 %v224, 7
    %v226 = vsub.s32 0, %v225
    %v227 = vrot.slane %v222, %v226
    %v245 = vunpack.c.l.b16 %v206
    %v246 = vunpack.c.l.b16 %v207
    %v247 = vunpack.c.l.b16 %v208
    %v248 = vunpack.c.l.b16 %v209
    %v249 = vunpack.c.l.b16 %v210
    %v250 = vunpack.c.l.b16 %v211
    %v251 = vunpack.c.l.b16 %v212
    %v252 = vunpack.c.l.b16 %v213
    %v253 = vunpack.c.l.b16 %v214
    %v254 = vunpack.c.l.b16 %v215
    %v255 = vunpack.c.l.b16 %v216
    %v256 = vunpack.c.l.b16 %v217
    %v257 = vunpack.c.l.b16 %v218
    %v258 = vunpack.c.l.b16 %v219
    %v259 = vunpack.c.l.b16 %v220
    %v260 = vunpack.c.l.b16 %v221
    %v261 = vpack.c.b16 %v246, %v245
    %v262 = vpack.c.b16 %v248, %v247
    %v263 = vpack.c.b16 %v250, %v249
    %v264 = vpack.c.b16 %v252, %v251
    %v265 = vpack.c.b16 %v254, %v253
    %v266 = vpack.c.b16 %v256, %v255
    %v267 = vpack.c.b16 %v258, %v257
    %v268 = vpack.c.b16 %v260, %v259
    %277 = vmatprep.subr.bf16.mxu0 0
    %278 = vmatpush1.bf16.msra.mxu0 %v268
    %279 = vmatprep.subr.bf16.mxu0 0
    %280 = vmatpush1.bf16.msra.mxu0 %v267
    %281 = vmatprep.subr.bf16.mxu0 0
    %282 = vmatpush1.bf16.msra.mxu0 %v266
    %283 = vmatprep.subr.bf16.mxu0 0
    %284 = vmatpush1.bf16.msra.mxu0 %v265
    %285 = vmatprep.subr.bf16.mxu0 0
    %286 = vmatpush1.bf16.msra.mxu0 %v264
    %287 = vmatprep.subr.bf16.mxu0 0
    %288 = vmatpush1.bf16.msra.mxu0 %v263
    %289 = vmatprep.subr.bf16.mxu0 0
    %290 = vmatpush1.bf16.msra.mxu0 %v262
    %291 = vmatprep.subr.bf16.mxu0 0
    %292 = vmatpush1.bf16.msra.mxu0 %v261
    %293 = vmatprep.subr.bf16.mxu0 0
    %294 = vmatpush2.bf16.msra.mxu0 0
    %295 = vmatprep.subr.bf16.mxu0 0
    %296 = vmatpush2.bf16.msra.mxu0 0
    %297 = vmatprep.subr.bf16.mxu0 0
    %298 = vmatpush2.bf16.msra.mxu0 0
    %299 = vmatprep.subr.bf16.mxu0 0
    %300 = vmatpush2.bf16.msra.mxu0 0
    %301 = vmatprep.subr.bf16.mxu0 0
    %302 = vmatpush2.bf16.msra.mxu0 0
    %303 = vmatprep.subr.bf16.mxu0 0
    %304 = vmatpush2.bf16.msra.mxu0 0
    %305 = vmatprep.subr.bf16.mxu0 0
    %306 = vmatpush2.bf16.msra.mxu0 0
    %307 = vmatprep.subr.bf16.mxu0 0
    %308 = vmatpush2.bf16.msra.mxu0 0
    %309 = vmatprep.mubr.bf16.mxu0 0
    %310 = vmatmul.mubr.bf16.gmra.mxu0 %v205
    %v311 = vpop.f32.mrf.mxu0
    %v312 = vadd.f32 %v227, %v311
    %v313 = vpop.f32.mrf.mxu0
    %v314 = vpop.f32.mrf.mxu0
    %v315 = vadd.f32 %v227, %v314
    %v316 = vpop.f32.mrf.mxu0
    %317 = vdwg.mxu0
    %v318 = vtanh.pop %v312
    %v319 = vtanh.pop %v315
    %v320 = vpack.c.bf16 %v319, %v318
    %v321 = vld [vmem:[#allocation7] sm:$0xf]
    %v322 = vld [vmem:[#allocation7 + $0x4] sm:$0xf]
    %v323 = vld [vmem:[#allocation7 + $0x8] sm:$0xf]
    %v324 = vld [vmem:[#allocation7 + $0xc] sm:$0xf]
    %v325 = vld [vmem:[#allocation7 + $0x10] sm:$0xf]
    %v326 = vld [vmem:[#allocation7 + $0x14] sm:$0xf]
    %v327 = vld [vmem:[#allocation7 + $0x18] sm:$0xf]
    %v328 = vld [vmem:[#allocation7 + $0x1c] sm:$0xf]
    %v329 = vld [vmem:[#allocation7 + $0x20] sm:$0xf]
    %v330 = vld [vmem:[#allocation7 + $0x24] sm:$0xf]
    %v331 = vld [vmem:[#allocation7 + $0x28] sm:$0xf]
    %v332 = vld [vmem:[#allocation7 + $0x2c] sm:$0xf]
    %v333 = vld [vmem:[#allocation7 + $0x30] sm:$0xf]
    %v334 = vld [vmem:[#allocation7 + $0x34] sm:$0xf]
    %v335 = vld [vmem:[#allocation7 + $0x38] sm:$0xf]
    %v336 = vld [vmem:[#allocation7 + $0x3c] sm:$0xf]
    %v337 = vld [vmem:[%s6] sm:$0x1]
    %v339 = vlaneseq
    %v340 = vshrl.u32 %v339, 7
    %v341 = vsub.s32 0, %v340
    %v342 = vrot.slane %v337, %v341
    %v360 = vunpack.c.l.b16 %v321
    %v361 = vunpack.c.l.b16 %v322
    %v362 = vunpack.c.l.b16 %v323
    %v363 = vunpack.c.l.b16 %v324
    %v364 = vunpack.c.l.b16 %v325
    %v365 = vunpack.c.l.b16 %v326
    %v366 = vunpack.c.l.b16 %v327
    %v367 = vunpack.c.l.b16 %v328
    %v368 = vunpack.c.l.b16 %v329
    %v369 = vunpack.c.l.b16 %v330
    %v370 = vunpack.c.l.b16 %v331
    %v371 = vunpack.c.l.b16 %v332
    %v372 = vunpack.c.l.b16 %v333
    %v373 = vunpack.c.l.b16 %v334
    %v374 = vunpack.c.l.b16 %v335
    %v375 = vunpack.c.l.b16 %v336
    %v376 = vpack.c.b16 %v361, %v360
    %v377 = vpack.c.b16 %v363, %v362
    %v378 = vpack.c.b16 %v365, %v364
    %v379 = vpack.c.b16 %v367, %v366
    %v380 = vpack.c.b16 %v369, %v368
    %v381 = vpack.c.b16 %v371, %v370
    %v382 = vpack.c.b16 %v373, %v372
    %v383 = vpack.c.b16 %v375, %v374
    %392 = vmatprep.subr.bf16.mxu0 0
    %393 = vmatpush1.bf16.msra.mxu0 %v383
    %394 = vmatprep.subr.bf16.mxu0 0
    %395 = vmatpush1.bf16.msra.mxu0 %v382
    %396 = vmatprep.subr.bf16.mxu0 0
    %397 = vmatpush1.bf16.msra.mxu0 %v381
    %398 = vmatprep.subr.bf16.mxu0 0
    %399 = vmatpush1.bf16.msra.mxu0 %v380
    %400 = vmatprep.subr.bf16.mxu0 0
    %401 = vmatpush1.bf16.msra.mxu0 %v379
    %402 = vmatprep.subr.bf16.mxu0 0
    %403 = vmatpush1.bf16.msra.mxu0 %v378
    %404 = vmatprep.subr.bf16.mxu0 0
    %405 = vmatpush1.bf16.msra.mxu0 %v377
    %406 = vmatprep.subr.bf16.mxu0 0
    %407 = vmatpush1.bf16.msra.mxu0 %v376
    %408 = vmatprep.subr.bf16.mxu0 0
    %409 = vmatpush2.bf16.msra.mxu0 0
    %410 = vmatprep.subr.bf16.mxu0 0
    %411 = vmatpush2.bf16.msra.mxu0 0
    %412 = vmatprep.subr.bf16.mxu0 0
    %413 = vmatpush2.bf16.msra.mxu0 0
    %414 = vmatprep.subr.bf16.mxu0 0
    %415 = vmatpush2.bf16.msra.mxu0 0
    %416 = vmatprep.subr.bf16.mxu0 0
    %417 = vmatpush2.bf16.msra.mxu0 0
    %418 = vmatprep.subr.bf16.mxu0 0
    %419 = vmatpush2.bf16.msra.mxu0 0
    %420 = vmatprep.subr.bf16.mxu0 0
    %421 = vmatpush2.bf16.msra.mxu0 0
    %422 = vmatprep.subr.bf16.mxu0 0
    %423 = vmatpush2.bf16.msra.mxu0 0
    %424 = vmatprep.mubr.bf16.mxu0 0
    %425 = vmatmul.mubr.bf16.gmra.mxu0 %v320
    %v426 = vpop.f32.mrf.mxu0
    %v427 = vadd.f32 %v342, %v426
    %v428 = vpop.f32.mrf.mxu0
    %v429 = vpop.f32.mrf.mxu0
    %v430 = vadd.f32 %v342, %v429
    %v431 = vpop.f32.mrf.mxu0
    %432 = vdwg.mxu0
    %vm433 = vcmask 31744
    %434 = vst.msk [vmem:[%s7] sm:$0xff] %vm433, %v427
    %435 = vst.msk [vmem:[%s7 + $0x8] sm:$0xff] %vm433, %v430
    // Predicated region
    $region42: #{tpu_custom_call.1} parent=1 // pred_check
      _
    $region43: #{tpu_custom_call.1} parent=1 // pred_check_branch
      %437 = sbr.rel (0) target = $region45
    $region44: #{tpu_custom_call.1} parent=1 // pred_region
      _
    $region45: #{tpu_custom_call.1} parent=1 // pred_fallthru
      _
    // Predicated region
    $region46: #{tpu_custom_call.1} parent=1 // pred_check
      _
    $region47: #{tpu_custom_call.1} parent=1 // pred_check_branch
      %439 = sbr.rel (0) target = $region49
    $region48: #{tpu_custom_call.1} parent=1 // pred_region
      _
    $region49: #{tpu_custom_call.1} parent=1 // pred_fallthru
      _
    %440 = vsyncpa [#allocation4], 1
    %441 = vsyncpa [#allocation6], 1

</llo_original>
